<compile_context>
chip_gen: v6e
topology: v6e:2x2x1
jax: 0.10.0
libtpu: 0.0.40
codegen_flags: <defaults>
</compile_context>

<pallas_src>
import numpy as np

import jax
import jax.numpy as jnp
from jax import lax
from jax.experimental import pallas as pl
from jax.experimental.pallas import tpu as pltpu


_X_TILE_BYTES_TARGET = 2 * 1024 * 1024   # input bytes per grid step
_MIN_GRID_STEPS = 4                      # 2 TensorCores (v7x) x double-buffer


def _largest_divisor_leq(n, cap):
    cap = max(1, min(n, cap))
    for d in range(cap, 0, -1):
        if n % d == 0:
            return d
    return 1


def _build_avg_matrix(l, kernel_size, stride, pad, l_out):
    """(L_out, L) f32 matrix A such that A @ x == replicate-padded AvgPool1d.

    Row t carries weight 1/K at every (clamped) original index covered by the
    window starting at padded position t*stride; clamped edge indices collect
    multiple 1/K weights, reproducing the front/end replication exactly.
    """
    starts = np.arange(l_out) * stride - pad                        # (L_out,)
    idx = np.clip(starts[:, None] + np.arange(kernel_size)[None, :], 0, l - 1)
    a = np.zeros((l_out, l), np.float32)
    np.add.at(a, (np.repeat(np.arange(l_out), kernel_size), idx.reshape(-1)),
              1.0)
    return jnp.asarray(a / np.float32(kernel_size))


def _choose_tiles(b, l, c, itemsize):
    """Pick (b_tile, c_tile):
      * c_tile a multiple of 128 (lane-dense stores) when C allows,
      * b_tile sized so each grid step reads ~2 MiB of input (~4-6 MiB of HBM
        moved per step with the fused outputs),
      * >= _MIN_GRID_STEPS grid steps kept when the problem is big enough so
        both v7x TensorCores get work and can still double-buffer.
    """
    if c >= 128 and c % 128 == 0:
        units = c // 128
        cap = max(1, _X_TILE_BYTES_TARGET // (l * 128 * itemsize))
        c_tile = 128 * _largest_divisor_leq(units, cap)
    else:
        # TODO(synk): C < 128 leaves lane-masked stores; folding batch into the
        # lane axis would need a wrapper-side transpose (extra HBM pass).
        c_tile = c
    slab = l * c_tile * itemsize
    b_tile = _largest_divisor_leq(b, max(1, _X_TILE_BYTES_TARGET // slab))

    # Prefer shrinking the batch fold, then the channel tile.
    while (b // b_tile) * (c // c_tile) < _MIN_GRID_STEPS and b_tile > 1:
        b_tile = _largest_divisor_leq(b, b_tile - 1)
    if ((b // b_tile) * (c // c_tile) < _MIN_GRID_STEPS
            and c % 128 == 0 and c // 128 > 1):
        units = c // 128
        need = -(-_MIN_GRID_STEPS // (b // b_tile))      # ceil division
        c_tile = 128 * _largest_divisor_leq(units, max(1, units // need))
    return b_tile, c_tile


def _series_decomp_kernel(a_ref, x_ref, res_ref, mean_ref):
    """One grid step: x (Bt, L, Ct) -> res (Bt, L, Ct), mean (Bt, L, Ct)."""
    def body(bi, carry):
        xb = x_ref[bi].astype(jnp.float32)                       # (L, Ct)
        m = jnp.dot(a_ref[...], xb,
                    precision=lax.Precision.HIGHEST,
                    preferred_element_type=jnp.float32)           # (L, Ct)
        mean_ref[bi] = m.astype(mean_ref.dtype)
        res_ref[bi] = (xb - m).astype(res_ref.dtype)              # fused residual
        return carry
    lax.fori_loop(0, x_ref.shape[0], body, 0)


def _moving_avg_kernel(a_ref, x_ref, mean_ref):
    """One grid step: x (Bt, L, Ct) -> mean (Bt, L_out, Ct)."""
    def body(bi, carry):
        xb = x_ref[bi].astype(jnp.float32)                        # (L, Ct)
        m = jnp.dot(a_ref[...], xb,
                    precision=lax.Precision.HIGHEST,
                    preferred_element_type=jnp.float32)           # (L_out, Ct)
        mean_ref[bi] = m.astype(mean_ref.dtype)
        return carry
    lax.fori_loop(0, x_ref.shape[0], body, 0)


def _decomp_pallas_call(x, a, l_out, fuse_residual):
    b, l, c = x.shape
    b_tile, c_tile = _choose_tiles(b, l, c, x.dtype.itemsize)
    grid = (b // b_tile, c // c_tile)

    # A's block index never changes -> DMA'd once, stays resident across steps.
    a_spec = pl.BlockSpec((l_out, l), lambda i, j: (0, 0))
    x_spec = pl.BlockSpec((b_tile, l, c_tile), lambda i, j: (i, 0, j))
    mean_spec = pl.BlockSpec((b_tile, l_out, c_tile), lambda i, j: (i, 0, j))

    itemsize = x.dtype.itemsize
    tile_bytes = (l_out * l * 4
                  + b_tile * l * c_tile * itemsize
                  + b_tile * l_out * c_tile * itemsize
                  + (b_tile * l * c_tile * itemsize if fuse_residual else 0))
    # Double-buffered tiles + headroom; explicitly above v5e's 16 MiB default
    # scoped limit, comfortably under v7x's 64 MiB physical VMEM.
    vmem_limit = min(max(2 * tile_bytes + (8 << 20), 32 << 20), 60 << 20)

    params = pltpu.CompilerParams(
        dimension_semantics=("parallel", "parallel"),
        vmem_limit_bytes=vmem_limit)

    if fuse_residual:
        out_shape = (jax.ShapeDtypeStruct((b, l, c), x.dtype),
                     jax.ShapeDtypeStruct((b, l_out, c), x.dtype))
        out_specs = (pl.BlockSpec((b_tile, l, c_tile), lambda i, j: (i, 0, j)),
                     mean_spec)
        return pl.pallas_call(
            _series_decomp_kernel, out_shape=out_shape, grid=grid,
            in_specs=[a_spec, x_spec], out_specs=out_specs,
            compiler_params=params)(a, x)

    out_shape = jax.ShapeDtypeStruct((b, l_out, c), x.dtype)
    return pl.pallas_call(
        _moving_avg_kernel, out_shape=out_shape, grid=grid,
        in_specs=[a_spec, x_spec], out_specs=mean_spec,
        compiler_params=params)(a, x)


def moving_avg(x, kernel_size, stride=1):
    """Autoformer moving_avg forward: x (B, L, C) -> (B, L_out, C)."""
    _, l, _ = x.shape
    pad = (kernel_size - 1) // 2
    l_out = (l + 2 * pad - kernel_size) // stride + 1
    a = _build_avg_matrix(l, kernel_size, stride, pad, l_out)
    return _decomp_pallas_call(x, a, l_out, fuse_residual=False)


def series_decomp(x, kernel_size):
    """Autoformer series_decomp (used inside every EncoderLayer).

    Returns (residual, moving_mean); the residual is fused into the same
    kernel so x is read from HBM exactly once.
    """
    _, l, _ = x.shape
    pad = (kernel_size - 1) // 2
    l_out = l + 2 * pad - kernel_size + 1
    if l_out != l:
        # Even kernel_size: output length differs from L (PyTorch would also
        # fail on x - mean); keep an unfused path for completeness.
        mean = moving_avg(x, kernel_size, stride=1)
        return x - mean, mean
    a = _build_avg_matrix(l, kernel_size, 1, pad, l_out)
    res, mean = _decomp_pallas_call(x, a, l_out, fuse_residual=True)
    return res, mean


def _reference(x, kernel_size, stride):
    """Pure-JAX reference mirroring the PyTorch moving_avg module."""
    b, l, c = x.shape
    pad = (kernel_size - 1) // 2
    if pad > 0:
        front = jnp.broadcast_to(x[:, :1, :], (b, pad, c))
        end = jnp.broadcast_to(x[:, -1:, :], (b, pad, c))
        xp = jnp.concatenate([front, x, end], axis=1)
    else:
        xp = x
    l_out = (l + 2 * pad - kernel_size) // stride + 1
    outs = [jnp.mean(xp[:, t * stride:t * stride + kernel_size, :], axis=1)
            for t in range(l_out)]
    return jnp.stack(outs, axis=1)


if __name__ == "__main__":
    k1, k2, k3 = jax.random.split(jax.random.PRNGKey(0), 3)

    # Case 1: Autoformer EncoderLayer decomposition -- default kernel_size=25,
    # lane-dense d_model=128; exercises the fused-residual path.
    B, L, C = 2, 32, 128
    x1 = jax.random.normal(k1, (B, L, C), dtype=jnp.float32)
    res1, mean1 = series_decomp(x1, 25)
    jax.block_until_ready((res1, mean1))
    ref1 = _reference(x1, 25, 1)
    assert mean1.shape == ref1.shape, (mean1.shape, ref1.shape)
    assert jnp.allclose(mean1, ref1, atol=1e-5, rtol=1e-5), "K=25 mean mismatch"
    assert jnp.allclose(res1, x1 - ref1, atol=1e-5, rtol=1e-5), \
        "K=25 residual mismatch"

    # Case 2: small odd kernel, tiny channel count (masked-lane store path).
    x2 = jax.random.normal(k2, (2, 16, 8), dtype=jnp.float32)
    out2 = jax.block_until_ready(moving_avg(x2, 5, 1))
    ref2 = _reference(x2, 5, 1)
    assert out2.shape == ref2.shape, (out2.shape, ref2.shape)
    assert jnp.allclose(out2, ref2, atol=1e-5, rtol=1e-5), "K=5 mismatch"

    # Case 3: even kernel with stride=2 (L_out != L), plain moving_avg.
    x3 = jax.random.normal(k3, (2, 16, 8), dtype=jnp.float32)
    out3 = jax.block_until_ready(moving_avg(x3, 4, 2))
    ref3 = _reference(x3, 4, 2)
    assert out3.shape == ref3.shape, (out3.shape, ref3.shape)
    assert jnp.allclose(out3, ref3, atol=1e-5, rtol=1e-5), "K=4/stride=2 mismatch"

    print("KERNEL_OK")
</pallas_src>

<mosaic_0001>
module attributes {stable_mosaic.version = 11 : i64} {
  func.func @_series_decomp_kernel(%arg0: i32, %arg1: i32, %arg2: memref<32x32xf32, #tpu.memory_space<vmem>>, %arg3: memref<1x32x128xf32, #tpu.memory_space<vmem>>, %arg4: memref<1x32x128xf32, #tpu.memory_space<vmem>>, %arg5: memref<1x32x128xf32, #tpu.memory_space<vmem>>) attributes {dimension_semantics = [#tpu.dimension_semantics<parallel>, #tpu.dimension_semantics<parallel>], iteration_bounds = array<i64: 2, 1>, scalar_prefetch = 0 : i64, scratch_operands = 0 : i64, tpu.core_type = #tpu.core_type<tc>, window_params = [{pipeline_mode = #tpu.pipeline_mode<synchronous>, transform_indices = @transform_0, window_bounds = array<i64: 32, 32>}, {transform_indices = @transform_1, window_bounds = array<i64: 1, 32, 128>}, {transform_indices = @transform_2, window_bounds = array<i64: 1, 32, 128>}, {transform_indices = @transform_3, window_bounds = array<i64: 1, 32, 128>}]} {
    %c0_i32 = arith.constant 0 : i32
    %0 = arith.index_cast %c0_i32 : i32 to index
    %c0 = arith.constant 0 : index
    %c0_0 = arith.constant 0 : index
    %1 = vector.load %arg3[%0, %c0, %c0_0] : memref<1x32x128xf32, #tpu.memory_space<vmem>>, vector<1x32x128xf32>
    %2 = vector.shape_cast %1 : vector<1x32x128xf32> to vector<32x128xf32>
    %c0_1 = arith.constant 0 : index
    %c0_2 = arith.constant 0 : index
    %3 = vector.load %arg2[%c0_1, %c0_2] : memref<32x32xf32, #tpu.memory_space<vmem>>, vector<32x32xf32>
    %cst = arith.constant dense<0.000000e+00> : vector<32x128xf32>
    %4 = tpu.matmul %3, %2, %cst {dimension_numbers = #tpu.dot_dimension_numbers<[1], [0], [0], [1], [0, 0, 1, 1], [], []>, precision = #tpu.contract_precision<fp32>} : vector<32x32xf32>, vector<32x128xf32>, vector<32x128xf32> -> vector<32x128xf32>
    %5 = arith.index_cast %c0_i32 : i32 to index
    %c0_3 = arith.constant 0 : index
    %c0_4 = arith.constant 0 : index
    %6 = vector.load %arg5[%5, %c0_3, %c0_4] : memref<1x32x128xf32, #tpu.memory_space<vmem>>, vector<1x32x128xf32>
    %7 = vector.shape_cast %6 : vector<1x32x128xf32> to vector<32x128xf32>
    %8 = vector.shape_cast %4 : vector<32x128xf32> to vector<1x32x128xf32>
    tpu.vector_store %arg5[%5, %c0_3, %c0_4], %8 {strides = array<i32>} : memref<1x32x128xf32, #tpu.memory_space<vmem>>, vector<1x32x128xf32>,
    %9 = arith.subf %2, %4 : vector<32x128xf32>
    %10 = arith.index_cast %c0_i32 : i32 to index
    %c0_5 = arith.constant 0 : index
    %c0_6 = arith.constant 0 : index
    %11 = vector.load %arg4[%10, %c0_5, %c0_6] : memref<1x32x128xf32, #tpu.memory_space<vmem>>, vector<1x32x128xf32>
    %12 = vector.shape_cast %11 : vector<1x32x128xf32> to vector<32x128xf32>
    %13 = vector.shape_cast %9 : vector<32x128xf32> to vector<1x32x128xf32>
    tpu.vector_store %arg4[%10, %c0_5, %c0_6], %13 {strides = array<i32>} : memref<1x32x128xf32, #tpu.memory_space<vmem>>, vector<1x32x128xf32>,
    %c1_i32 = arith.constant 1 : i32
    return
  }
  func.func @transform_0(%arg0: i32, %arg1: i32) -> (i32, i32) {
    %c0_i32 = arith.constant 0 : i32
    %c0_i32_0 = arith.constant 0 : i32
    %c0_i32_1 = arith.constant 0 : i32
    return %c0_i32, %c0_i32_0 : i32, i32
  }
  func.func @transform_1(%arg0: i32, %arg1: i32) -> (i32, i32, i32) {
    %c0_i32 = arith.constant 0 : i32
    %c0_i32_0 = arith.constant 0 : i32
    return %arg0, %c0_i32, %arg1 : i32, i32, i32
  }
  func.func @transform_2(%arg0: i32, %arg1: i32) -> (i32, i32, i32) {
    %c0_i32 = arith.constant 0 : i32
    %c0_i32_0 = arith.constant 0 : i32
    return %arg0, %c0_i32, %arg1 : i32, i32, i32
  }
  func.func @transform_3(%arg0: i32, %arg1: i32) -> (i32, i32, i32) {
    %c0_i32 = arith.constant 0 : i32
    %c0_i32_0 = arith.constant 0 : i32
    return %arg0, %c0_i32, %arg1 : i32, i32, i32
  }
}

</mosaic_0001>

<llo_original>
// kernel: tpu_custom_call.1
$region0: #{tpu_custom_call.1}
  #allocation0 [shape = 'u32[]', space=smem, size = 0x4, offset = 0x4, fixed_abs, tag = 'smem constant byte address 0x4 - core index']
  #allocation1 [shape = 'u32[144,128]{1,0:T(1,128)}', space=vmem, size = 0x12000, scoped, tag = 'internal scratch']
  %s0 = inlined_call_operand.hbm [shape: f32[32,32], index: 0, kind: input, shape index: {}]
  %s1 = inlined_call_operand.hbm [shape: f32[2,32,128], index: 1, kind: input, shape index: {}]
  %s2 = inlined_call_operand.hbm [shape: f32[2,32,128], index: 2, kind: output, shape index: {0}]
  %s3 = inlined_call_operand.hbm [shape: f32[2,32,128], index: 3, kind: output, shape index: {1}]
  %4 = xla_tuple %s2, %s3
  %s5 = sld [smem:[#allocation0]]
  $region57: #{tpu_custom_call.1} parent=0
    _
  %s7 = ssub.s32 1, %s5
  %s8 = scalar_select 0, %s7, %s5
  $region1: #{tpu_custom_call.1} parent=0
    #allocation2 [shape = 'u8[16384]{0}', space=vmem, size = 0x4000, scoped, tag = 'input window, operand 0, single buffered']
    #allocation3 [shape = 's32[2]{0}', space=sflag, size = 0x8, scoped, tag = 'scoped memory for tpu_custom_call.1']
    #allocation4 [shape = 's32[2]{0}', space=sflag, size = 0x8, scoped, tag = 'scoped memory for tpu_custom_call.1']
    #allocation5 [shape = 'u8[32768]{0}', space=vmem, size = 0x8000, scoped, tag = 'input window, operand 1']
    #allocation6 [shape = 's32[2]{0}', space=sflag, size = 0x8, scoped, tag = 'scoped memory for tpu_custom_call.1']
    #allocation7 [shape = 'u8[32768]{0}', space=vmem, size = 0x8000, scoped, tag = 'output window, operand 0']
    #allocation8 [shape = 'u8[32768]{0}', space=vmem, size = 0x8000, scoped, tag = 'output window, operand 1']
    #allocation9 [shape = 's32[2]{0}', space=sflag, size = 0x8, scoped, tag = 'scoped memory for tpu_custom_call.1']
    %9 = vsyncpa [#allocation3], 0
    %10 = vsyncpa [#allocation6], 0
    %s11 = scalar_lea.sflag [#allocation6], 1
    %12 = vsyncpa %s11, 0
    %13 = vsyncpa [#allocation4], 0
    %s14 = scalar_lea.sflag [#allocation4], 1
    %15 = vsyncpa %s14, 0
    %16 = vsyncpa [#allocation9], 0
    %s17 = scalar_lea.sflag [#allocation9], 1
    %18 = vsyncpa %s17, 0
    loop: start=0, step=1, limit=4
    $region2: #{tpu_custom_call.1} parent=1 // loop_pre_header
      _
    $region3: #{tpu_custom_call.1} parent=1 // loop_header
      %s20 = sphi 0, %s24
      %p21 = scmp.ge.s32.totalorder %s20, 4
      %s27 = sphi 0, %s39
      %s28 = sphi 0, %s35
      %s29 = sphi 0, %s27
      %s30 = sphi 0, %s28
      %s31 = sphi 0, %s29
      %s32 = sphi 0, %s30
      %s40 = sphi 0, %s40
      %s42 = sphi 0, %s40
      %s43 = sphi 0, %s42
      %s57 = sphi 0, %s43
      %s65 = sphi 0, %s67
      %s68 = sphi 0, %s65
      %s69 = sphi 0, %s68
      %s85 = sphi 0, %s69
      %s93 = sphi 0, %s95
      %s96 = sphi 0, %s93
      %s97 = sphi 0, %s96
      %s113 = sphi 0, %s97
      %s121 = sphi 0, %s123
      %s124 = sphi 0, %s121
      %s125 = sphi 0, %s124
      %s141 = sphi 0, %s125
    $region4: #{tpu_custom_call.1} parent=1 // loop_header_branch
      %23 = sbr.rel (%p21) target = $region8
    $region5: #{tpu_custom_call.1} parent=1 // loop_body
      %s25 = ssub.s32 %s20, 1
      %s26 = ssub.s32 %s20, 2
      %s33 = sadd.s32 1, %s28
      %p34 = scmp.ge.s32.totalorder %s33, 1
      %s35 = scalar_select %p34, 0, %s33
      %s36 = sadd.s32 1, %s27
      %s37 = scalar_select %p34, %s36, %s27
      %p38 = scmp.ge.s32.totalorder %s37, 2
      %s39 = scalar_select %p38, 0, %s37
      %s41 = sadd.s32 %s40, 1
      %p44 = scmp.eq.s32.totalorder %s20, 1
      %p45 = scmp.ne.s32.totalorder %s40, %s42
      %p46 = scmp.eq.s32.totalorder %s20, 0
      %p47 = por %p45, %p46
      %p48 = scmp.ne.s32.totalorder %s40, %s42
      %p49 = scmp.eq.s32.totalorder %s25, 1
      %p50 = por %p48, %p49
      %p51 = scmp.ne.s32.totalorder %s42, %s43
      %p52 = scmp.eq.s32.totalorder %s25, 0
      %p53 = por %p51, %p52
      %p54 = scmp.ne.s32.totalorder %s42, %s43
      %p55 = scmp.eq.s32.totalorder %s26, 1
      %p56 = por %p54, %p55
      %p58 = scmp.ne.s32.totalorder %s43, %s57
      %p59 = scmp.eq.s32.totalorder %s26, 0
      %p60 = por %p58, %p59
      %s61 = ssub.s32 %s27, %s39
      %s62 = ssub.s32 %s28, %s35
      %s63 = sor.u32 %s61, %s62
      %p64 = scmp.eq.s32.totalorder %s63, 0
      %s66 = sadd.s32 %s65, 1
      %s67 = scalar_select %p64, %s65, %s66
      %p70 = pneg %p64
      %p71 = scmp.eq.s32.totalorder %s20, 1
      %p72 = por %p70, %p71
      %p73 = scmp.ne.s32.totalorder %s65, %s68
      %p74 = scmp.eq.s32.totalorder %s20, 0
      %p75 = por %p73, %p74
      %p76 = scmp.ne.s32.totalorder %s65, %s68
      %p77 = scmp.eq.s32.totalorder %s25, 1
      %p78 = por %p76, %p77
      %p79 = scmp.ne.s32.totalorder %s68, %s69
      %p80 = scmp.eq.s32.totalorder %s25, 0
      %p81 = por %p79, %p80
      %p82 = scmp.ne.s32.totalorder %s68, %s69
      %p83 = scmp.eq.s32.totalorder %s26, 1
      %p84 = por %p82, %p83
      %p86 = scmp.ne.s32.totalorder %s69, %s85
      %p87 = scmp.eq.s32.totalorder %s26, 0
      %p88 = por %p86, %p87
      %s89 = ssub.s32 %s27, %s39
      %s90 = ssub.s32 %s28, %s35
      %s91 = sor.u32 %s89, %s90
      %p92 = scmp.eq.s32.totalorder %s91, 0
      %s94 = sadd.s32 %s93, 1
      %s95 = scalar_select %p92, %s93, %s94
      %p98 = pneg %p92
      %p99 = scmp.eq.s32.totalorder %s20, 1
      %p100 = por %p98, %p99
      %p101 = scmp.ne.s32.totalorder %s93, %s96
      %p102 = scmp.eq.s32.totalorder %s20, 0
      %p103 = por %p101, %p102
      %p104 = scmp.ne.s32.totalorder %s93, %s96
      %p105 = scmp.eq.s32.totalorder %s25, 1
      %p106 = por %p104, %p105
      %p107 = scmp.ne.s32.totalorder %s96, %s97
      %p108 = scmp.eq.s32.totalorder %s25, 0
      %p109 = por %p107, %p108
      %p110 = scmp.ne.s32.totalorder %s96, %s97
      %p111 = scmp.eq.s32.totalorder %s26, 1
      %p112 = por %p110, %p111
      %p114 = scmp.ne.s32.totalorder %s97, %s113
      %p115 = scmp.eq.s32.totalorder %s26, 0
      %p116 = por %p114, %p115
      %s117 = ssub.s32 %s27, %s39
      %s118 = ssub.s32 %s28, %s35
      %s119 = sor.u32 %s117, %s118
      %p120 = scmp.eq.s32.totalorder %s119, 0
      %s122 = sadd.s32 %s121, 1
      %s123 = scalar_select %p120, %s121, %s122
      %p126 = pneg %p120
      %p127 = scmp.eq.s32.totalorder %s20, 1
      %p128 = por %p126, %p127
      %p129 = scmp.ne.s32.totalorder %s121, %s124
      %p130 = scmp.eq.s32.totalorder %s20, 0
      %p131 = por %p129, %p130
      %p132 = scmp.ne.s32.totalorder %s121, %s124
      %p133 = scmp.eq.s32.totalorder %s25, 1
      %p134 = por %p132, %p133
      %p135 = scmp.ne.s32.totalorder %s124, %s125
      %p136 = scmp.eq.s32.totalorder %s25, 0
      %p137 = por %p135, %p136
      %p138 = scmp.ne.s32.totalorder %s124, %s125
      %p139 = scmp.eq.s32.totalorder %s26, 1
      %p140 = por %p138, %p139
      %p142 = scmp.ne.s32.totalorder %s125, %s141
      %p143 = scmp.eq.s32.totalorder %s26, 0
      %p144 = por %p142, %p143
      %p145 = scmp.le.s32.totalorder 1, %s20
      %p146 = scmp.lt.s32.totalorder %s20, 3
      %p147 = pnand %p145, %p146
      %p148 = pneg %p147
      // Predicated region
      $region9: #{tpu_custom_call.1} parent=5 // pred_check
        _
      $region10: #{tpu_custom_call.1} parent=5 // pred_check_branch
        %150 = sbr.rel (%p147) target = $region12
      $region11: #{tpu_custom_call.1} parent=5 // pred_region
        %s151 = ssub.s32 %s20, 1
        // Predicated region
        $region13: #{tpu_custom_call.1} parent=11 // pred_check
          %p152 = pneg %p53
        $region14: #{tpu_custom_call.1} parent=11 // pred_check_branch
          %154 = sbr.rel (%p152) target = $region16
        $region15: #{tpu_custom_call.1} parent=11 // pred_region
          %s156 = ssub.s32 512, 512
          %157 = vsyncadd [#allocation3], %s156
          %s158 = sshll.u32 [#allocation2], 4
          %s159 = int_to_ptr.vmem [resolvable:$true] %s158
          %164 = dma.hbm_to_vmem [thread:$0]  %s0, 512, %s159, [#allocation3], 128, 128, 8
        $region16: #{tpu_custom_call.1} parent=11 // pred_fallthru
          _
      $region12: #{tpu_custom_call.1} parent=5 // pred_fallthru
        _
      %p165 = scmp.lt.s32.totalorder %s20, 2
      // Predicated region
      $region17: #{tpu_custom_call.1} parent=5 // pred_check
        %p166 = pneg %p165
      $region18: #{tpu_custom_call.1} parent=5 // pred_check_branch
        %168 = sbr.rel (%p166) target = $region20
      $region19: #{tpu_custom_call.1} parent=5 // pred_region
        // Predicated region
        $region21: #{tpu_custom_call.1} parent=19 // pred_check
          %p169 = pneg %p75
        $region22: #{tpu_custom_call.1} parent=19 // pred_check_branch
          %171 = sbr.rel (%p169) target = $region24
        $region23: #{tpu_custom_call.1} parent=19 // pred_region
          %s172 = sand.u32 %s65, 1
          %s173 = scalar_lea.sflag [#allocation6], %s172
          %s174 = sand.u32 %s65, 1
          %s175 = smul.addr %s174, 32
          %s176 = scalar_lea.vmem [#allocation5], %s175
          %s178 = ssub.s32 512, 512
          %179 = vsyncadd %s173, %s178
          %s180 = smul.addr %s27, 4
          %s181 = sadd.s32 %s28, %s180
          %s182 = smul.addr %s181, 128
          %s183 = scalar_lea.hbm %s1, %s182
          %s184 = sshll.u32 %s176, 4
          %s185 = int_to_ptr.vmem [resolvable:$true] %s184
          %190 = dma.hbm_to_vmem [thread:$0]  %s183, 512, %s185, %s173, 128, 128, 8
        $region24: #{tpu_custom_call.1} parent=19 // pred_fallthru
          _
      $region20: #{tpu_custom_call.1} parent=5 // pred_fallthru
        _
      %p191 = scmp.le.s32.totalorder 1, %s20
      %p192 = scmp.lt.s32.totalorder %s20, 3
      %p193 = pnand %p191, %p192
      %p194 = pneg %p193
      // Predicated region
      $region25: #{tpu_custom_call.1} parent=5 // pred_check
        _
      $region26: #{tpu_custom_call.1} parent=5 // pred_check_branch
        %196 = sbr.rel (%p193) target = $region28
      $region27: #{tpu_custom_call.1} parent=5 // pred_region
        %s197 = ssub.s32 %s20, 1
        // Predicated region
        $region29: #{tpu_custom_call.1} parent=27 // pred_check
          %p198 = pneg %p53
        $region30: #{tpu_custom_call.1} parent=27 // pred_check_branch
          %200 = sbr.rel (%p198) target = $region32
        $region31: #{tpu_custom_call.1} parent=27 // pred_region
          %201 = dma.done [#allocation3], 512
        $region32: #{tpu_custom_call.1} parent=27 // pred_fallthru
          _
        %s202 = sand.u32 %s68, 1
        %s203 = scalar_lea.sflag [#allocation6], %s202
        %s204 = sand.u32 %s68, 1
        %s205 = smul.addr %s204, 32
        %s206 = scalar_lea.vmem [#allocation5], %s205
        // Predicated region
        $region33: #{tpu_custom_call.1} parent=27 // pred_check
          %p207 = pneg %p81
        $region34: #{tpu_custom_call.1} parent=27 // pred_check_branch
          %209 = sbr.rel (%p207) target = $region36
        $region35: #{tpu_custom_call.1} parent=27 // pred_region
          %210 = dma.done %s203, 512
        $region36: #{tpu_custom_call.1} parent=27 // pred_fallthru
          _
        %p211 = pneg %p53
        %p212 = pneg %p50
        %s213 = sand.u32 %s68, 1
        %s214 = scalar_lea.sflag [#allocation6], %s213
        %s215 = sand.u32 %s68, 1
        %s216 = smul.addr %s215, 32
        %s217 = scalar_lea.vmem [#allocation5], %s216
        %p218 = pneg %p81
        %p219 = pneg %p78
        %p220 = pneg %p109
        %p221 = pneg %p106
        %s222 = sand.u32 %s96, 1
        %s223 = scalar_lea.sflag [#allocation4], %s222
        %s224 = sand.u32 %s96, 1
        %s225 = smul.addr %s224, 32
        %s226 = scalar_lea.vmem [#allocation7], %s225
        %p227 = pneg %p137
        %p228 = pneg %p134
        %s229 = sand.u32 %s124, 1
        %s230 = scalar_lea.sflag [#allocation9], %s229
        %s231 = sand.u32 %s124, 1
        %s232 = smul.addr %s231, 32
        %s233 = scalar_lea.vmem [#allocation8], %s232
        %v234 = vld [vmem:[%s206] sm:$0xff]
        %v235 = vld [vmem:[%s206 + $0x8] sm:$0xff]
        %v236 = vld [vmem:[%s206 + $0x10] sm:$0xff]
        %v237 = vld [vmem:[%s206 + $0x18] sm:$0xff]
        %v238 = vld [vmem:[#allocation2] sm:$0xff]
        %v239 = vld [vmem:[#allocation2 + $0x8] sm:$0xff]
        %v240 = vld [vmem:[#allocation2 + $0x10] sm:$0xff]
        %v241 = vld [vmem:[#allocation2 + $0x18] sm:$0xff]
        %vm242 = vcmask 261120
        %v244 = vsel %vm242, %v238, 0
        %v247 = vsel %vm242, %v239, 0
        %v250 = vsel %vm242, %v240, 0
        %v253 = vsel %vm242, %v241, 0
        %255 = vmatprep.subr.mxu0 0.0
        %256 = vmatpush1.msra.mxu0 0.0
        %257 = vmatprep.subr.mxu0 0.0
        %258 = vmatpush1.msra.mxu0 0.0
        %259 = vmatprep.subr.mxu0 0.0
        %260 = vmatpush1.msra.mxu0 0.0
        %261 = vmatprep.subr.mxu0 0.0
        %262 = vmatpush1.msra.mxu0 0.0
        %263 = vmatprep.subr.mxu0 0.0
        %264 = vmatpush1.msra.mxu0 0.0
        %265 = vmatprep.subr.mxu0 0.0
        %266 = vmatpush1.msra.mxu0 0.0
        %267 = vmatprep.subr.mxu0 0.0
        %268 = vmatpush1.msra.mxu0 0.0
        %269 = vmatprep.subr.mxu0 0.0
        %270 = vmatpush1.msra.mxu0 0.0
        %271 = vmatprep.subr.mxu0 0.0
        %272 = vmatpush1.msra.mxu0 0.0
        %273 = vmatprep.subr.mxu0 0.0
        %274 = vmatpush1.msra.mxu0 0.0
        %275 = vmatprep.subr.mxu0 0.0
        %276 = vmatpush1.msra.mxu0 0.0
        %277 = vmatprep.subr.mxu0 0.0
        %278 = vmatpush1.msra.mxu0 0.0
        %279 = vmatprep.subr.mxu0 0.0
        %v280 = vand.u32 %v237, 4294901760
        %281 = vmatpush1.msra.mxu0 %v280
        %282 = vmatprep.subr.mxu0 0.0
        %v283 = vand.u32 %v236, 4294901760
        %284 = vmatpush1.msra.mxu0 %v283
        %285 = vmatprep.subr.mxu0 0.0
        %v286 = vand.u32 %v235, 4294901760
        %287 = vmatpush1.msra.mxu0 %v286
        %288 = vmatprep.subr.mxu0 0.0
        %v289 = vand.u32 %v234, 4294901760
        %290 = vmatpush1.msra.mxu0 %v289
        %291 = vmatprep.subr.mxu0 0.0
        %292 = vmatpush2.msra.mxu0 0.0
        %293 = vmatprep.subr.mxu0 0.0
        %294 = vmatpush2.msra.mxu0 0.0
        %295 = vmatprep.subr.mxu0 0.0
        %296 = vmatpush2.msra.mxu0 0.0
        %297 = vmatprep.subr.mxu0 0.0
        %298 = vmatpush2.msra.mxu0 0.0
        %299 = vmatprep.subr.mxu0 0.0
        %300 = vmatpush2.msra.mxu0 0.0
        %301 = vmatprep.subr.mxu0 0.0
        %302 = vmatpush2.msra.mxu0 0.0
        %303 = vmatprep.subr.mxu0 0.0
        %304 = vmatpush2.msra.mxu0 0.0
        %305 = vmatprep.subr.mxu0 0.0
        %306 = vmatpush2.msra.mxu0 0.0
        %307 = vmatprep.subr.mxu0 0.0
        %308 = vmatpush2.msra.mxu0 0.0
        %309 = vmatprep.subr.mxu0 0.0
        %310 = vmatpush2.msra.mxu0 0.0
        %311 = vmatprep.subr.mxu0 0.0
        %312 = vmatpush2.msra.mxu0 0.0
        %313 = vmatprep.subr.mxu0 0.0
        %314 = vmatpush2.msra.mxu0 0.0
        %315 = vmatprep.subr.mxu0 0.0
        %316 = vmatpush2.msra.mxu0 0.0
        %317 = vmatprep.subr.mxu0 0.0
        %318 = vmatpush2.msra.mxu0 0.0
        %319 = vmatprep.subr.mxu0 0.0
        %320 = vmatpush2.msra.mxu0 0.0
        %321 = vmatprep.subr.mxu0 0.0
        %322 = vmatpush2.msra.mxu0 0.0
        %323 = vmatprep.mubr.f32.mxu0 0.0
        %v324 = vand.u32 %v244, 4294901760
        %v325 = vsub.f32 %v244, %v324
        %v326 = vand.u32 %v325, 4294901760
        %v327 = vsub.f32 %v325, %v326
        %v328 = vand.u32 %v327, 4294901760
        %329 = vmatmul.mubr.f32.gmra.mxu0 %v328
        %v330 = vpop.f32.mrf.mxu0
        %v331 = vadd.f32 0.0, %v330
        %v332 = vpop.f32.mrf.mxu0
        %333 = vmatprep.mubr.f32.mxu0 0.0
        %v334 = vand.u32 %v247, 4294901760
        %v335 = vsub.f32 %v247, %v334
        %v336 = vand.u32 %v335, 4294901760
        %v337 = vsub.f32 %v335, %v336
        %v338 = vand.u32 %v337, 4294901760
        %339 = vmatmul.mubr.f32.gmra.mxu0 %v338
        %v340 = vpop.f32.mrf.mxu0
        %v341 = vadd.f32 0.0, %v340
        %v342 = vpop.f32.mrf.mxu0
        %343 = vmatprep.mubr.f32.mxu0 0.0
        %v344 = vand.u32 %v250, 4294901760
        %v345 = vsub.f32 %v250, %v344
        %v346 = vand.u32 %v345, 4294901760
        %v347 = vsub.f32 %v345, %v346
        %v348 = vand.u32 %v347, 4294901760
        %349 = vmatmul.mubr.f32.gmra.mxu0 %v348
        %v350 = vpop.f32.mrf.mxu0
        %v351 = vadd.f32 0.0, %v350
        %v352 = vpop.f32.mrf.mxu0
        %353 = vmatprep.mubr.f32.mxu0 0.0
        %v354 = vand.u32 %v253, 4294901760
        %v355 = vsub.f32 %v253, %v354
        %v356 = vand.u32 %v355, 4294901760
        %v357 = vsub.f32 %v355, %v356
        %v358 = vand.u32 %v357, 4294901760
        %359 = vmatmul.mubr.f32.gmra.mxu0 %v358
        %v360 = vpop.f32.mrf.mxu0
        %v361 = vadd.f32 0.0, %v360
        %v362 = vpop.f32.mrf.mxu0
        %363 = vdwg.mxu0
        %364 = vmatprep.subr.mxu0 0.0
        %365 = vmatpush1.msra.mxu0 0.0
        %366 = vmatprep.subr.mxu0 0.0
        %367 = vmatpush1.msra.mxu0 0.0
        %368 = vmatprep.subr.mxu0 0.0
        %369 = vmatpush1.msra.mxu0 0.0
        %370 = vmatprep.subr.mxu0 0.0
        %371 = vmatpush1.msra.mxu0 0.0
        %372 = vmatprep.subr.mxu0 0.0
        %373 = vmatpush1.msra.mxu0 0.0
        %374 = vmatprep.subr.mxu0 0.0
        %375 = vmatpush1.msra.mxu0 0.0
        %376 = vmatprep.subr.mxu0 0.0
        %377 = vmatpush1.msra.mxu0 0.0
        %378 = vmatprep.subr.mxu0 0.0
        %379 = vmatpush1.msra.mxu0 0.0
        %380 = vmatprep.subr.mxu0 0.0
        %381 = vmatpush1.msra.mxu0 0.0
        %382 = vmatprep.subr.mxu0 0.0
        %383 = vmatpush1.msra.mxu0 0.0
        %384 = vmatprep.subr.mxu0 0.0
        %385 = vmatpush1.msra.mxu0 0.0
        %386 = vmatprep.subr.mxu0 0.0
        %387 = vmatpush1.msra.mxu0 0.0
        %388 = vmatprep.subr.mxu0 0.0
        %v389 = vand.u32 %v237, 4294901760
        %v390 = vsub.f32 %v237, %v389
        %v391 = vand.u32 %v390, 4294901760
        %v392 = vsub.f32 %v390, %v391
        %v393 = vand.u32 %v392, 4294901760
        %394 = vmatpush1.msra.mxu0 %v393
        %395 = vmatprep.subr.mxu0 0.0
        %v396 = vand.u32 %v236, 4294901760
        %v397 = vsub.f32 %v236, %v396
        %v398 = vand.u32 %v397, 4294901760
        %v399 = vsub.f32 %v397, %v398
        %v400 = vand.u32 %v399, 4294901760
        %401 = vmatpush1.msra.mxu0 %v400
        %402 = vmatprep.subr.mxu0 0.0
        %v403 = vand.u32 %v235, 4294901760
        %v404 = vsub.f32 %v235, %v403
        %v405 = vand.u32 %v404, 4294901760
        %v406 = vsub.f32 %v404, %v405
        %v407 = vand.u32 %v406, 4294901760
        %408 = vmatpush1.msra.mxu0 %v407
        %409 = vmatprep.subr.mxu0 0.0
        %v410 = vand.u32 %v234, 4294901760
        %v411 = vsub.f32 %v234, %v410
        %v412 = vand.u32 %v411, 4294901760
        %v413 = vsub.f32 %v411, %v412
        %v414 = vand.u32 %v413, 4294901760
        %415 = vmatpush1.msra.mxu0 %v414
        %416 = vmatprep.subr.mxu0 0.0
        %417 = vmatpush2.msra.mxu0 0.0
        %418 = vmatprep.subr.mxu0 0.0
        %419 = vmatpush2.msra.mxu0 0.0
        %420 = vmatprep.subr.mxu0 0.0
        %421 = vmatpush2.msra.mxu0 0.0
        %422 = vmatprep.subr.mxu0 0.0
        %423 = vmatpush2.msra.mxu0 0.0
        %424 = vmatprep.subr.mxu0 0.0
        %425 = vmatpush2.msra.mxu0 0.0
        %426 = vmatprep.subr.mxu0 0.0
        %427 = vmatpush2.msra.mxu0 0.0
        %428 = vmatprep.subr.mxu0 0.0
        %429 = vmatpush2.msra.mxu0 0.0
        %430 = vmatprep.subr.mxu0 0.0
        %431 = vmatpush2.msra.mxu0 0.0
        %432 = vmatprep.subr.mxu0 0.0
        %433 = vmatpush2.msra.mxu0 0.0
        %434 = vmatprep.subr.mxu0 0.0
        %435 = vmatpush2.msra.mxu0 0.0
        %436 = vmatprep.subr.mxu0 0.0
        %437 = vmatpush2.msra.mxu0 0.0
        %438 = vmatprep.subr.mxu0 0.0
        %439 = vmatpush2.msra.mxu0 0.0
        %440 = vmatprep.subr.mxu0 0.0
        %441 = vmatpush2.msra.mxu0 0.0
        %442 = vmatprep.subr.mxu0 0.0
        %443 = vmatpush2.msra.mxu0 0.0
        %444 = vmatprep.subr.mxu0 0.0
        %445 = vmatpush2.msra.mxu0 0.0
        %446 = vmatprep.subr.mxu0 0.0
        %447 = vmatpush2.msra.mxu0 0.0
        %448 = vmatprep.mubr.f32.mxu0 0.0
        %v449 = vand.u32 %v244, 4294901760
        %450 = vmatmul.mubr.f32.gmra.mxu0 %v449
        %v451 = vpop.f32.mrf.mxu0
        %v452 = vadd.f32 %v331, %v451
        %v453 = vpop.f32.mrf.mxu0
        %454 = vmatprep.mubr.f32.mxu0 0.0
        %v455 = vand.u32 %v247, 4294901760
        %456 = vmatmul.mubr.f32.gmra.mxu0 %v455
        %v457 = vpop.f32.mrf.mxu0
        %v458 = vadd.f32 %v341, %v457
        %v459 = vpop.f32.mrf.mxu0
        %460 = vmatprep.mubr.f32.mxu0 0.0
        %v461 = vand.u32 %v250, 4294901760
        %462 = vmatmul.mubr.f32.gmra.mxu0 %v461
        %v463 = vpop.f32.mrf.mxu0
        %v464 = vadd.f32 %v351, %v463
        %v465 = vpop.f32.mrf.mxu0
        %466 = vmatprep.mubr.f32.mxu0 0.0
        %v467 = vand.u32 %v253, 4294901760
        %468 = vmatmul.mubr.f32.gmra.mxu0 %v467
        %v469 = vpop.f32.mrf.mxu0
        %v470 = vadd.f32 %v361, %v469
        %v471 = vpop.f32.mrf.mxu0
        %472 = vdwg.mxu0
        %473 = vmatprep.subr.mxu0 0.0
        %474 = vmatpush1.msra.mxu0 0.0
        %475 = vmatprep.subr.mxu0 0.0
        %476 = vmatpush1.msra.mxu0 0.0
        %477 = vmatprep.subr.mxu0 0.0
        %478 = vmatpush1.msra.mxu0 0.0
        %479 = vmatprep.subr.mxu0 0.0
        %480 = vmatpush1.msra.mxu0 0.0
        %481 = vmatprep.subr.mxu0 0.0
        %482 = vmatpush1.msra.mxu0 0.0
        %483 = vmatprep.subr.mxu0 0.0
        %484 = vmatpush1.msra.mxu0 0.0
        %485 = vmatprep.subr.mxu0 0.0
        %486 = vmatpush1.msra.mxu0 0.0
        %487 = vmatprep.subr.mxu0 0.0
        %488 = vmatpush1.msra.mxu0 0.0
        %489 = vmatprep.subr.mxu0 0.0
        %490 = vmatpush1.msra.mxu0 0.0
        %491 = vmatprep.subr.mxu0 0.0
        %492 = vmatpush1.msra.mxu0 0.0
        %493 = vmatprep.subr.mxu0 0.0
        %494 = vmatpush1.msra.mxu0 0.0
        %495 = vmatprep.subr.mxu0 0.0
        %496 = vmatpush1.msra.mxu0 0.0
        %497 = vmatprep.subr.mxu0 0.0
        %v498 = vand.u32 %v237, 4294901760
        %v499 = vsub.f32 %v237, %v498
        %500 = vmatpush1.msra.mxu0 %v499
        %501 = vmatprep.subr.mxu0 0.0
        %v502 = vand.u32 %v236, 4294901760
        %v503 = vsub.f32 %v236, %v502
        %504 = vmatpush1.msra.mxu0 %v503
        %505 = vmatprep.subr.mxu0 0.0
        %v506 = vand.u32 %v235, 4294901760
        %v507 = vsub.f32 %v235, %v506
        %508 = vmatpush1.msra.mxu0 %v507
        %509 = vmatprep.subr.mxu0 0.0
        %v510 = vand.u32 %v234, 4294901760
        %v511 = vsub.f32 %v234, %v510
        %512 = vmatpush1.msra.mxu0 %v511
        %513 = vmatprep.subr.mxu0 0.0
        %514 = vmatpush2.msra.mxu0 0.0
        %515 = vmatprep.subr.mxu0 0.0
        %516 = vmatpush2.msra.mxu0 0.0
        %517 = vmatprep.subr.mxu0 0.0
        %518 = vmatpush2.msra.mxu0 0.0
        %519 = vmatprep.subr.mxu0 0.0
        %520 = vmatpush2.msra.mxu0 0.0
        %521 = vmatprep.subr.mxu0 0.0
        %522 = vmatpush2.msra.mxu0 0.0
        %523 = vmatprep.subr.mxu0 0.0
        %524 = vmatpush2.msra.mxu0 0.0
        %525 = vmatprep.subr.mxu0 0.0
        %526 = vmatpush2.msra.mxu0 0.0
        %527 = vmatprep.subr.mxu0 0.0
        %528 = vmatpush2.msra.mxu0 0.0
        %529 = vmatprep.subr.mxu0 0.0
        %530 = vmatpush2.msra.mxu0 0.0
        %531 = vmatprep.subr.mxu0 0.0
        %532 = vmatpush2.msra.mxu0 0.0
        %533 = vmatprep.subr.mxu0 0.0
        %534 = vmatpush2.msra.mxu0 0.0
        %535 = vmatprep.subr.mxu0 0.0
        %536 = vmatpush2.msra.mxu0 0.0
        %537 = vmatprep.subr.mxu0 0.0
        %538 = vmatpush2.msra.mxu0 0.0
        %539 = vmatprep.subr.mxu0 0.0
        %540 = vmatpush2.msra.mxu0 0.0
        %541 = vmatprep.subr.mxu0 0.0
        %542 = vmatpush2.msra.mxu0 0.0
        %543 = vmatprep.subr.mxu0 0.0
        %544 = vmatpush2.msra.mxu0 0.0
        %545 = vmatprep.mubr.f32.mxu0 0.0
        %v546 = vand.u32 %v244, 4294901760
        %v547 = vsub.f32 %v244, %v546
        %548 = vmatmul.mubr.f32.gmra.mxu0 %v547
        %v549 = vpop.f32.mrf.mxu0
        %v550 = vadd.f32 %v452, %v549
        %v551 = vpop.f32.mrf.mxu0
        %552 = vmatprep.mubr.f32.mxu0 0.0
        %v553 = vand.u32 %v247, 4294901760
        %v554 = vsub.f32 %v247, %v553
        %555 = vmatmul.mubr.f32.gmra.mxu0 %v554
        %v556 = vpop.f32.mrf.mxu0
        %v557 = vadd.f32 %v458, %v556
        %v558 = vpop.f32.mrf.mxu0
        %559 = vmatprep.mubr.f32.mxu0 0.0
        %v560 = vand.u32 %v250, 4294901760
        %v561 = vsub.f32 %v250, %v560
        %562 = vmatmul.mubr.f32.gmra.mxu0 %v561
        %v563 = vpop.f32.mrf.mxu0
        %v564 = vadd.f32 %v464, %v563
        %v565 = vpop.f32.mrf.mxu0
        %566 = vmatprep.mubr.f32.mxu0 0.0
        %v567 = vand.u32 %v253, 4294901760
        %v568 = vsub.f32 %v253, %v567
        %569 = vmatmul.mubr.f32.gmra.mxu0 %v568
        %v570 = vpop.f32.mrf.mxu0
        %v571 = vadd.f32 %v470, %v570
        %v572 = vpop.f32.mrf.mxu0
        %573 = vdwg.mxu0
        %574 = vmatprep.subr.mxu0 0.0
        %575 = vmatpush1.msra.mxu0 0.0
        %576 = vmatprep.subr.mxu0 0.0
        %577 = vmatpush1.msra.mxu0 0.0
        %578 = vmatprep.subr.mxu0 0.0
        %579 = vmatpush1.msra.mxu0 0.0
        %580 = vmatprep.subr.mxu0 0.0
        %581 = vmatpush1.msra.mxu0 0.0
        %582 = vmatprep.subr.mxu0 0.0
        %583 = vmatpush1.msra.mxu0 0.0
        %584 = vmatprep.subr.mxu0 0.0
        %585 = vmatpush1.msra.mxu0 0.0
        %586 = vmatprep.subr.mxu0 0.0
        %587 = vmatpush1.msra.mxu0 0.0
        %588 = vmatprep.subr.mxu0 0.0
        %589 = vmatpush1.msra.mxu0 0.0
        %590 = vmatprep.subr.mxu0 0.0
        %591 = vmatpush1.msra.mxu0 0.0
        %592 = vmatprep.subr.mxu0 0.0
        %593 = vmatpush1.msra.mxu0 0.0
        %594 = vmatprep.subr.mxu0 0.0
        %595 = vmatpush1.msra.mxu0 0.0
        %596 = vmatprep.subr.mxu0 0.0
        %597 = vmatpush1.msra.mxu0 0.0
        %598 = vmatprep.subr.mxu0 0.0
        %v599 = vand.u32 %v237, 4294901760
        %600 = vmatpush1.msra.mxu0 %v599
        %601 = vmatprep.subr.mxu0 0.0
        %v602 = vand.u32 %v236, 4294901760
        %603 = vmatpush1.msra.mxu0 %v602
        %604 = vmatprep.subr.mxu0 0.0
        %v605 = vand.u32 %v235, 4294901760
        %606 = vmatpush1.msra.mxu0 %v605
        %607 = vmatprep.subr.mxu0 0.0
        %v608 = vand.u32 %v234, 4294901760
        %609 = vmatpush1.msra.mxu0 %v608
        %610 = vmatprep.subr.mxu0 0.0
        %611 = vmatpush2.msra.mxu0 0.0
        %612 = vmatprep.subr.mxu0 0.0
        %613 = vmatpush2.msra.mxu0 0.0
        %614 = vmatprep.subr.mxu0 0.0
        %615 = vmatpush2.msra.mxu0 0.0
        %616 = vmatprep.subr.mxu0 0.0
        %617 = vmatpush2.msra.mxu0 0.0
        %618 = vmatprep.subr.mxu0 0.0
        %619 = vmatpush2.msra.mxu0 0.0
        %620 = vmatprep.subr.mxu0 0.0
        %621 = vmatpush2.msra.mxu0 0.0
        %622 = vmatprep.subr.mxu0 0.0
        %623 = vmatpush2.msra.mxu0 0.0
        %624 = vmatprep.subr.mxu0 0.0
        %625 = vmatpush2.msra.mxu0 0.0
        %626 = vmatprep.subr.mxu0 0.0
        %627 = vmatpush2.msra.mxu0 0.0
        %628 = vmatprep.subr.mxu0 0.0
        %629 = vmatpush2.msra.mxu0 0.0
        %630 = vmatprep.subr.mxu0 0.0
        %631 = vmatpush2.msra.mxu0 0.0
        %632 = vmatprep.subr.mxu0 0.0
        %633 = vmatpush2.msra.mxu0 0.0
        %634 = vmatprep.subr.mxu0 0.0
        %635 = vmatpush2.msra.mxu0 0.0
        %636 = vmatprep.subr.mxu0 0.0
        %637 = vmatpush2.msra.mxu0 0.0
        %638 = vmatprep.subr.mxu0 0.0
        %639 = vmatpush2.msra.mxu0 0.0
        %640 = vmatprep.subr.mxu0 0.0
        %641 = vmatpush2.msra.mxu0 0.0
        %642 = vmatprep.mubr.f32.mxu0 0.0
        %v643 = vand.u32 %v244, 4294901760
        %v644 = vsub.f32 %v244, %v643
        %v645 = vand.u32 %v644, 4294901760
        %646 = vmatmul.mubr.f32.gmra.mxu0 %v645
        %v647 = vpop.f32.mrf.mxu0
        %v648 = vadd.f32 %v550, %v647
        %v649 = vpop.f32.mrf.mxu0
        %650 = vmatprep.mubr.f32.mxu0 0.0
        %v651 = vand.u32 %v247, 4294901760
        %v652 = vsub.f32 %v247, %v651
        %v653 = vand.u32 %v652, 4294901760
        %654 = vmatmul.mubr.f32.gmra.mxu0 %v653
        %v655 = vpop.f32.mrf.mxu0
        %v656 = vadd.f32 %v557, %v655
        %v657 = vpop.f32.mrf.mxu0
        %658 = vmatprep.mubr.f32.mxu0 0.0
        %v659 = vand.u32 %v250, 4294901760
        %v660 = vsub.f32 %v250, %v659
        %v661 = vand.u32 %v660, 4294901760
        %662 = vmatmul.mubr.f32.gmra.mxu0 %v661
        %v663 = vpop.f32.mrf.mxu0
        %v664 = vadd.f32 %v564, %v663
        %v665 = vpop.f32.mrf.mxu0
        %666 = vmatprep.mubr.f32.mxu0 0.0
        %v667 = vand.u32 %v253, 4294901760
        %v668 = vsub.f32 %v253, %v667
        %v669 = vand.u32 %v668, 4294901760
        %670 = vmatmul.mubr.f32.gmra.mxu0 %v669
        %v671 = vpop.f32.mrf.mxu0
        %v672 = vadd.f32 %v571, %v671
        %v673 = vpop.f32.mrf.mxu0
        %674 = vdwg.mxu0
        %675 = vmatprep.subr.mxu0 0.0
        %676 = vmatpush1.msra.mxu0 0.0
        %677 = vmatprep.subr.mxu0 0.0
        %678 = vmatpush1.msra.mxu0 0.0
        %679 = vmatprep.subr.mxu0 0.0
        %680 = vmatpush1.msra.mxu0 0.0
        %681 = vmatprep.subr.mxu0 0.0
        %682 = vmatpush1.msra.mxu0 0.0
        %683 = vmatprep.subr.mxu0 0.0
        %684 = vmatpush1.msra.mxu0 0.0
        %685 = vmatprep.subr.mxu0 0.0
        %686 = vmatpush1.msra.mxu0 0.0
        %687 = vmatprep.subr.mxu0 0.0
        %688 = vmatpush1.msra.mxu0 0.0
        %689 = vmatprep.subr.mxu0 0.0
        %690 = vmatpush1.msra.mxu0 0.0
        %691 = vmatprep.subr.mxu0 0.0
        %692 = vmatpush1.msra.mxu0 0.0
        %693 = vmatprep.subr.mxu0 0.0
        %694 = vmatpush1.msra.mxu0 0.0
        %695 = vmatprep.subr.mxu0 0.0
        %696 = vmatpush1.msra.mxu0 0.0
        %697 = vmatprep.subr.mxu0 0.0
        %698 = vmatpush1.msra.mxu0 0.0
        %699 = vmatprep.subr.mxu0 0.0
        %v700 = vand.u32 %v237, 4294901760
        %v701 = vsub.f32 %v237, %v700
        %v702 = vand.u32 %v701, 4294901760
        %703 = vmatpush1.msra.mxu0 %v702
        %704 = vmatprep.subr.mxu0 0.0
        %v705 = vand.u32 %v236, 4294901760
        %v706 = vsub.f32 %v236, %v705
        %v707 = vand.u32 %v706, 4294901760
        %708 = vmatpush1.msra.mxu0 %v707
        %709 = vmatprep.subr.mxu0 0.0
        %v710 = vand.u32 %v235, 4294901760
        %v711 = vsub.f32 %v235, %v710
        %v712 = vand.u32 %v711, 4294901760
        %713 = vmatpush1.msra.mxu0 %v712
        %714 = vmatprep.subr.mxu0 0.0
        %v715 = vand.u32 %v234, 4294901760
        %v716 = vsub.f32 %v234, %v715
        %v717 = vand.u32 %v716, 4294901760
        %718 = vmatpush1.msra.mxu0 %v717
        %719 = vmatprep.subr.mxu0 0.0
        %720 = vmatpush2.msra.mxu0 0.0
        %721 = vmatprep.subr.mxu0 0.0
        %722 = vmatpush2.msra.mxu0 0.0
        %723 = vmatprep.subr.mxu0 0.0
        %724 = vmatpush2.msra.mxu0 0.0
        %725 = vmatprep.subr.mxu0 0.0
        %726 = vmatpush2.msra.mxu0 0.0
        %727 = vmatprep.subr.mxu0 0.0
        %728 = vmatpush2.msra.mxu0 0.0
        %729 = vmatprep.subr.mxu0 0.0
        %730 = vmatpush2.msra.mxu0 0.0
        %731 = vmatprep.subr.mxu0 0.0
        %732 = vmatpush2.msra.mxu0 0.0
        %733 = vmatprep.subr.mxu0 0.0
        %734 = vmatpush2.msra.mxu0 0.0
        %735 = vmatprep.subr.mxu0 0.0
        %736 = vmatpush2.msra.mxu0 0.0
        %737 = vmatprep.subr.mxu0 0.0
        %738 = vmatpush2.msra.mxu0 0.0
        %739 = vmatprep.subr.mxu0 0.0
        %740 = vmatpush2.msra.mxu0 0.0
        %741 = vmatprep.subr.mxu0 0.0
        %742 = vmatpush2.msra.mxu0 0.0
        %743 = vmatprep.subr.mxu0 0.0
        %744 = vmatpush2.msra.mxu0 0.0
        %745 = vmatprep.subr.mxu0 0.0
        %746 = vmatpush2.msra.mxu0 0.0
        %747 = vmatprep.subr.mxu0 0.0
        %748 = vmatpush2.msra.mxu0 0.0
        %749 = vmatprep.subr.mxu0 0.0
        %750 = vmatpush2.msra.mxu0 0.0
        %751 = vmatprep.mubr.f32.mxu0 0.0
        %v752 = vand.u32 %v244, 4294901760
        %753 = vmatmul.mubr.f32.gmra.mxu0 %v752
        %v754 = vpop.f32.mrf.mxu0
        %v755 = vadd.f32 %v648, %v754
        %v756 = vpop.f32.mrf.mxu0
        %757 = vmatprep.mubr.f32.mxu0 0.0
        %v758 = vand.u32 %v247, 4294901760
        %759 = vmatmul.mubr.f32.gmra.mxu0 %v758
        %v760 = vpop.f32.mrf.mxu0
        %v761 = vadd.f32 %v656, %v760
        %v762 = vpop.f32.mrf.mxu0
        %763 = vmatprep.mubr.f32.mxu0 0.0
        %v764 = vand.u32 %v250, 4294901760
        %765 = vmatmul.mubr.f32.gmra.mxu0 %v764
        %v766 = vpop.f32.mrf.mxu0
        %v767 = vadd.f32 %v664, %v766
        %v768 = vpop.f32.mrf.mxu0
        %769 = vmatprep.mubr.f32.mxu0 0.0
        %v770 = vand.u32 %v253, 4294901760
        %771 = vmatmul.mubr.f32.gmra.mxu0 %v770
        %v772 = vpop.f32.mrf.mxu0
        %v773 = vadd.f32 %v672, %v772
        %v774 = vpop.f32.mrf.mxu0
        %775 = vdwg.mxu0
        %776 = vmatprep.subr.mxu0 0.0
        %777 = vmatpush1.msra.mxu0 0.0
        %778 = vmatprep.subr.mxu0 0.0
        %779 = vmatpush1.msra.mxu0 0.0
        %780 = vmatprep.subr.mxu0 0.0
        %781 = vmatpush1.msra.mxu0 0.0
        %782 = vmatprep.subr.mxu0 0.0
        %783 = vmatpush1.msra.mxu0 0.0
        %784 = vmatprep.subr.mxu0 0.0
        %785 = vmatpush1.msra.mxu0 0.0
        %786 = vmatprep.subr.mxu0 0.0
        %787 = vmatpush1.msra.mxu0 0.0
        %788 = vmatprep.subr.mxu0 0.0
        %789 = vmatpush1.msra.mxu0 0.0
        %790 = vmatprep.subr.mxu0 0.0
        %791 = vmatpush1.msra.mxu0 0.0
        %792 = vmatprep.subr.mxu0 0.0
        %793 = vmatpush1.msra.mxu0 0.0
        %794 = vmatprep.subr.mxu0 0.0
        %795 = vmatpush1.msra.mxu0 0.0
        %796 = vmatprep.subr.mxu0 0.0
        %797 = vmatpush1.msra.mxu0 0.0
        %798 = vmatprep.subr.mxu0 0.0
        %799 = vmatpush1.msra.mxu0 0.0
        %800 = vmatprep.subr.mxu0 0.0
        %v801 = vand.u32 %v237, 4294901760
        %802 = vmatpush1.msra.mxu0 %v801
        %803 = vmatprep.subr.mxu0 0.0
        %v804 = vand.u32 %v236, 4294901760
        %805 = vmatpush1.msra.mxu0 %v804
        %806 = vmatprep.subr.mxu0 0.0
        %v807 = vand.u32 %v235, 4294901760
        %808 = vmatpush1.msra.mxu0 %v807
        %809 = vmatprep.subr.mxu0 0.0
        %v810 = vand.u32 %v234, 4294901760
        %811 = vmatpush1.msra.mxu0 %v810
        %812 = vmatprep.subr.mxu0 0.0
        %813 = vmatpush2.msra.mxu0 0.0
        %814 = vmatprep.subr.mxu0 0.0
        %815 = vmatpush2.msra.mxu0 0.0
        %816 = vmatprep.subr.mxu0 0.0
        %817 = vmatpush2.msra.mxu0 0.0
        %818 = vmatprep.subr.mxu0 0.0
        %819 = vmatpush2.msra.mxu0 0.0
        %820 = vmatprep.subr.mxu0 0.0
        %821 = vmatpush2.msra.mxu0 0.0
        %822 = vmatprep.subr.mxu0 0.0
        %823 = vmatpush2.msra.mxu0 0.0
        %824 = vmatprep.subr.mxu0 0.0
        %825 = vmatpush2.msra.mxu0 0.0
        %826 = vmatprep.subr.mxu0 0.0
        %827 = vmatpush2.msra.mxu0 0.0
        %828 = vmatprep.subr.mxu0 0.0
        %829 = vmatpush2.msra.mxu0 0.0
        %830 = vmatprep.subr.mxu0 0.0
        %831 = vmatpush2.msra.mxu0 0.0
        %832 = vmatprep.subr.mxu0 0.0
        %833 = vmatpush2.msra.mxu0 0.0
        %834 = vmatprep.subr.mxu0 0.0
        %835 = vmatpush2.msra.mxu0 0.0
        %836 = vmatprep.subr.mxu0 0.0
        %837 = vmatpush2.msra.mxu0 0.0
        %838 = vmatprep.subr.mxu0 0.0
        %839 = vmatpush2.msra.mxu0 0.0
        %840 = vmatprep.subr.mxu0 0.0
        %841 = vmatpush2.msra.mxu0 0.0
        %842 = vmatprep.subr.mxu0 0.0
        %843 = vmatpush2.msra.mxu0 0.0
        %844 = vmatprep.mubr.f32.mxu0 0.0
        %v845 = vand.u32 %v244, 4294901760
        %846 = vmatmul.mubr.f32.gmra.mxu0 %v845
        %v847 = vpop.f32.mrf.mxu0
        %v848 = vadd.f32 %v755, %v847
        %v849 = vpop.f32.mrf.mxu0
        %850 = vmatprep.mubr.f32.mxu0 0.0
        %v851 = vand.u32 %v247, 4294901760
        %852 = vmatmul.mubr.f32.gmra.mxu0 %v851
        %v853 = vpop.f32.mrf.mxu0
        %v854 = vadd.f32 %v761, %v853
        %v855 = vpop.f32.mrf.mxu0
        %856 = vmatprep.mubr.f32.mxu0 0.0
        %v857 = vand.u32 %v250, 4294901760
        %858 = vmatmul.mubr.f32.gmra.mxu0 %v857
        %v859 = vpop.f32.mrf.mxu0
        %v860 = vadd.f32 %v767, %v859
        %v861 = vpop.f32.mrf.mxu0
        %862 = vmatprep.mubr.f32.mxu0 0.0
        %v863 = vand.u32 %v253, 4294901760
        %864 = vmatmul.mubr.f32.gmra.mxu0 %v863
        %v865 = vpop.f32.mrf.mxu0
        %v866 = vadd.f32 %v773, %v865
        %v867 = vpop.f32.mrf.mxu0
        %868 = vdwg.mxu0
        %869 = vst [vmem:[%s233] sm:$0xff] %v848
        %870 = vst [vmem:[%s233 + $0x8] sm:$0xff] %v854
        %871 = vst [vmem:[%s233 + $0x10] sm:$0xff] %v860
        %872 = vst [vmem:[%s233 + $0x18] sm:$0xff] %v866
        %v873 = vsub.f32 %v234, %v848
        %v874 = vsub.f32 %v235, %v854
        %v875 = vsub.f32 %v236, %v860
        %v876 = vsub.f32 %v237, %v866
        %877 = vst [vmem:[%s226] sm:$0xff] %v873
        %878 = vst [vmem:[%s226 + $0x8] sm:$0xff] %v874
        %879 = vst [vmem:[%s226 + $0x10] sm:$0xff] %v875
        %880 = vst [vmem:[%s226 + $0x18] sm:$0xff] %v876
        %s881 = sand.u32 %s96, 1
        %s882 = scalar_lea.sflag [#allocation4], %s881
        %s883 = sand.u32 %s96, 1
        %s884 = smul.addr %s883, 32
        %s885 = scalar_lea.vmem [#allocation7], %s884
        %s886 = sand.u32 %s124, 1
        %s887 = scalar_lea.sflag [#allocation9], %s886
        %s888 = sand.u32 %s124, 1
        %s889 = smul.addr %s888, 32
        %s890 = scalar_lea.vmem [#allocation8], %s889
        // Predicated region
        $region37: #{tpu_custom_call.1} parent=27 // pred_check
          %p891 = pneg %p106
        $region38: #{tpu_custom_call.1} parent=27 // pred_check_branch
          %893 = sbr.rel (%p891) target = $region40
        $region39: #{tpu_custom_call.1} parent=27 // pred_region
          %s895 = ssub.s32 512, 512
          %896 = vsyncadd %s882, %s895
          %s897 = smul.addr %s29, 4
          %s898 = sadd.s32 %s30, %s897
          %s899 = smul.addr %s898, 128
          %s900 = scalar_lea.hbm %s2, %s899
          %s901 = sshll.u32 %s885, 4
          %s902 = int_to_ptr.vmem [resolvable:$true] %s901
          %907 = dma.vmem_to_hbm [thread:$0]  %s902, 512, %s900, %s882, 128, 128, 8
        $region40: #{tpu_custom_call.1} parent=27 // pred_fallthru
          _
        // Predicated region
        $region41: #{tpu_custom_call.1} parent=27 // pred_check
          %p908 = pneg %p134
        $region42: #{tpu_custom_call.1} parent=27 // pred_check_branch
          %910 = sbr.rel (%p908) target = $region44
        $region43: #{tpu_custom_call.1} parent=27 // pred_region
          %s912 = ssub.s32 512, 512
          %913 = vsyncadd %s887, %s912
          %s914 = smul.addr %s29, 4
          %s915 = sadd.s32 %s30, %s914
          %s916 = smul.addr %s915, 128
          %s917 = scalar_lea.hbm %s3, %s916
          %s918 = sshll.u32 %s890, 4
          %s919 = int_to_ptr.vmem [resolvable:$true] %s918
          %924 = dma.vmem_to_hbm [thread:$0]  %s919, 512, %s917, %s887, 128, 128, 8
        $region44: #{tpu_custom_call.1} parent=27 // pred_fallthru
          _
      $region28: #{tpu_custom_call.1} parent=5 // pred_fallthru
        _
      %p925 = scmp.le.s32.totalorder 2, %s20
      // Predicated region
      $region45: #{tpu_custom_call.1} parent=5 // pred_check
        %p926 = pneg %p925
      $region46: #{tpu_custom_call.1} parent=5 // pred_check_branch
        %928 = sbr.rel (%p926) target = $region48
      $region47: #{tpu_custom_call.1} parent=5 // pred_region
        %s929 = ssub.s32 %s20, 2
        // Predicated region
        $region49: #{tpu_custom_call.1} parent=47 // pred_check
          %p930 = pneg %p112
        $region50: #{tpu_custom_call.1} parent=47 // pred_check_branch
          %932 = sbr.rel (%p930) target = $region52
        $region51: #{tpu_custom_call.1} parent=47 // pred_region
          %s933 = sand.u32 %s97, 1
          %s934 = scalar_lea.sflag [#allocation4], %s933
          %s935 = sand.u32 %s97, 1
          %s936 = smul.addr %s935, 32
          %s937 = scalar_lea.vmem [#allocation7], %s936
          %938 = dma.done %s934, 512
        $region52: #{tpu_custom_call.1} parent=47 // pred_fallthru
          _
        // Predicated region
        $region53: #{tpu_custom_call.1} parent=47 // pred_check
          %p939 = pneg %p140
        $region54: #{tpu_custom_call.1} parent=47 // pred_check_branch
          %941 = sbr.rel (%p939) target = $region56
        $region55: #{tpu_custom_call.1} parent=47 // pred_region
          %s942 = sand.u32 %s125, 1
          %s943 = scalar_lea.sflag [#allocation9], %s942
          %s944 = sand.u32 %s125, 1
          %s945 = smul.addr %s944, 32
          %s946 = scalar_lea.vmem [#allocation8], %s945
          %947 = dma.done %s943, 512
        $region56: #{tpu_custom_call.1} parent=47 // pred_fallthru
          _
      $region48: #{tpu_custom_call.1} parent=5 // pred_fallthru
        _
    $region6: #{tpu_custom_call.1} parent=1 // loop_footer
      %s24 = sadd.s32 1, %s20
    $region7: #{tpu_custom_call.1} parent=1 // loop_footer_branch
      %19 = sbr.rel target = $region3
    $region8: #{tpu_custom_call.1} parent=1 // loop_exit
      _
    %948 = vsyncpa [#allocation3], 1
    %s949 = scalar_lea.sflag [#allocation3], 1
    %950 = vsyncpa %s949, 1
    %951 = vsyncpa [#allocation6], 1
    %s952 = scalar_lea.sflag [#allocation6], 1
    %953 = vsyncpa %s952, 1
    %954 = vsyncpa [#allocation4], 1
    %s955 = scalar_lea.sflag [#allocation4], 1
    %956 = vsyncpa %s955, 1
    %957 = vsyncpa [#allocation9], 1
    %s958 = scalar_lea.sflag [#allocation9], 1
    %959 = vsyncpa %s958, 1

</llo_original>
